<compile_context>
chip_gen: v7x
topology: tpu7x:2x2x1
jax: 0.10.0
libtpu: 0.0.40
codegen_flags: <defaults>
</compile_context>

<pallas_src>
import jax
import jax.numpy as jnp
from jax import lax
from jax.experimental import pallas as pl
from jax.experimental.pallas import tpu as pltpu


def _round_up(n, m):
    return ((n + m - 1) // m) * m


def _cdiv(a, b):
    return -(-a // b)


def aq_network_kernel(x_ref, w1_ref, b1_ref, w2_ref, b2_ref, o_ref):
    """One batch tile.

    x_ref : (TB, obs)      batch-major tile, straight from HBM (no wrapper transpose)
    w1_ref: (hidden, obs)  VMEM-resident (constant block index across the grid)
    b1_ref: (hidden, 1)
    w2_ref: (A, hidden)
    b2_ref: (A, 1)
    o_ref : (A, TB)        lane-dense (batch in lanes) softmax probabilities
    """
    x = x_ref[...]                                               # (TB, obs)
    # Linear 1 + ReLU, feature-major result:
    #   contract obs of W1 (hidden, obs) with obs of x (TB, obs) -> (hidden, TB)
    h = lax.dot_general(w1_ref[...], x, (((1,), (1,)), ((), ())),
                        preferred_element_type=jnp.float32)
    h = jnp.maximum(h + b1_ref[...], 0.0)                        # b1: (hidden, 1)
    # Linear 2: (A, hidden) @ (hidden, TB) -> (A, TB), lane-dense.
    z = jnp.dot(w2_ref[...], h, preferred_element_type=jnp.float32)
    z = z + b2_ref[...]                                          # b2: (A, 1)
    # Numerically stable softmax over the action axis (axis 0 = sublanes).
    z_max = jnp.max(z, axis=0, keepdims=True)                    # (1, TB)
    e = jnp.exp(z - z_max)
    denom = jnp.sum(e, axis=0, keepdims=True)                    # (1, TB)
    # Exact division: kernel is memory/overhead bound, so this is free and
    # keeps every probability row summing to 1 to float32 precision.
    o_ref[...] = (e / denom).astype(o_ref.dtype)


def aq_network_forward(x, w1, b1, w2, b2, *, block_b=16384):
    """x: (B, obs) f32 (PyTorch layout).
       w1: (hidden, obs), b1: (hidden,), w2: (n_actions, hidden), b2: (n_actions,)
       (PyTorch nn.Linear layout).  Returns softmax probabilities (B, n_actions)."""
    B, obs = x.shape
    hidden = w1.shape[0]
    n_actions = w2.shape[0]

    # --- batch tiling -----------------------------------------------------
    # Lane-multiple tiles.  TB is derived from cdiv(B, n_tiles) so the tail
    # padding never exceeds ~128 rows per tile (no rounding B up by a whole
    # max-size tile), and n_tiles is kept >= 2 when B allows it so the
    # "parallel" grid axis can be split across the two v7x TensorCores.
    TB_max = max(128, _round_up(block_b, 128))
    B128 = _round_up(B, 128)
    n_tiles = max(1, _cdiv(B128, TB_max))
    if n_tiles == 1 and B128 >= 2 * 128:
        n_tiles = 2
    TB = _round_up(_cdiv(B128, n_tiles), 128)
    B_pad = TB * n_tiles

    x_pad = x if B_pad == B else jnp.pad(x, ((0, B_pad - B), (0, 0)))
    b1_col = b1.reshape(hidden, 1)
    b2_col = b2.reshape(n_actions, 1)

    flops = 2 * B_pad * (obs * hidden + hidden * n_actions) + 6 * B_pad * n_actions
    transcendentals = B_pad * n_actions
    bytes_accessed = 4 * (B_pad * obs + B_pad * n_actions
                          + hidden * obs + hidden + n_actions * hidden + n_actions)

    out_t = pl.pallas_call(
        aq_network_kernel,
        out_shape=jax.ShapeDtypeStruct((n_actions, B_pad), jnp.float32),
        grid_spec=pl.GridSpec(
            grid=(n_tiles,),
            in_specs=[
                # batch-tiled input: new block each step (auto double-buffered DMA)
                pl.BlockSpec((TB, obs), lambda i: (i, 0)),
                # weights/biases: constant block index -> stay VMEM-resident
                pl.BlockSpec((hidden, obs), lambda i: (0, 0)),
                pl.BlockSpec((hidden, 1), lambda i: (0, 0)),
                pl.BlockSpec((n_actions, hidden), lambda i: (0, 0)),
                pl.BlockSpec((n_actions, 1), lambda i: (0, 0)),
            ],
            out_specs=pl.BlockSpec((n_actions, TB), lambda i: (0, i)),
        ),
        compiler_params=pltpu.CompilerParams(
            # Independent batch tiles -> megacore split on v7x; no-op on v5e/v6e.
            dimension_semantics=("parallel",),
            # ~20 MiB used at TB=16384 incl. lane-padded (TB, obs) buffers;
            # 48 MiB leaves headroom under v7x's 64 MiB physical VMEM.
            vmem_limit_bytes=48 * 1024 * 1024,
        ),
        cost_estimate=pl.CostEstimate(
            flops=flops,
            transcendentals=transcendentals,
            bytes_accessed=bytes_accessed,
        ),
    )(x_pad, w1, b1_col, w2, b2_col)

    # Layout plumbing only on the small (n_actions, B) output; the dominant x
    # stream is consumed directly in its PyTorch (B, obs) layout.
    return out_t[:, :B].T


def init_params(key, obs_size, n_actions, hidden=28):
    """nn.Linear-style init, PyTorch weight layout (out_features, in_features)."""
    k1, k2, k3, k4 = jax.random.split(key, 4)
    lim1 = 1.0 / jnp.sqrt(obs_size)
    lim2 = 1.0 / jnp.sqrt(hidden)
    w1 = jax.random.uniform(k1, (hidden, obs_size), jnp.float32, -lim1, lim1)
    b1 = jax.random.uniform(k2, (hidden,), jnp.float32, -lim1, lim1)
    w2 = jax.random.uniform(k3, (n_actions, hidden), jnp.float32, -lim2, lim2)
    b2 = jax.random.uniform(k4, (n_actions,), jnp.float32, -lim2, lim2)
    return w1, b1, w2, b2


def _reference(x, w1, b1, w2, b2):
    h = jnp.maximum(x @ w1.T + b1, 0.0)
    return jax.nn.softmax(h @ w2.T + b2, axis=1)


if __name__ == "__main__":
    obs_size, n_actions, batch, hidden = 16, 4, 8, 28
    key = jax.random.PRNGKey(0)
    kx, kp = jax.random.split(key)
    x = jax.random.normal(kx, (batch, obs_size), jnp.float32)
    w1, b1, w2, b2 = init_params(kp, obs_size, n_actions, hidden)

    out = jax.block_until_ready(aq_network_forward(x, w1, b1, w2, b2))
    ref = _reference(x, w1, b1, w2, b2)

    assert out.shape == (batch, n_actions)
    assert jnp.allclose(out, ref, rtol=1e-4, atol=1e-5), "mismatch vs reference"
    assert jnp.allclose(jnp.sum(out, axis=1), 1.0, atol=1e-5), "rows not normalized"

    # Exercise the multi-tile grid path (adaptive tile size + tail padding).
    x2 = jax.random.normal(jax.random.PRNGKey(1), (300, obs_size), jnp.float32)
    out2 = jax.block_until_ready(
        aq_network_forward(x2, w1, b1, w2, b2, block_b=128))
    ref2 = _reference(x2, w1, b1, w2, b2)
    assert out2.shape == (300, n_actions)
    assert jnp.allclose(out2, ref2, rtol=1e-4, atol=1e-5), "multi-tile mismatch"
    assert jnp.allclose(jnp.sum(out2, axis=1), 1.0, atol=1e-5)

    print("KERNEL_OK")
</pallas_src>

<mosaic_0001>
module attributes {stable_mosaic.version = 11 : i64} {
  func.func @aq_network_kernel(%arg0: i32, %arg1: memref<128x16xf32, #tpu.memory_space<vmem>>, %arg2: memref<28x16xf32, #tpu.memory_space<vmem>>, %arg3: memref<28x1xf32, #tpu.memory_space<vmem>>, %arg4: memref<4x28xf32, #tpu.memory_space<vmem>>, %arg5: memref<4x1xf32, #tpu.memory_space<vmem>>, %arg6: memref<4x128xf32, #tpu.memory_space<vmem>>) attributes {dimension_semantics = [#tpu.dimension_semantics<parallel>], iteration_bounds = array<i64: 1>, scalar_prefetch = 0 : i64, scratch_operands = 0 : i64, tpu.core_type = #tpu.core_type<tc>, window_params = [{transform_indices = @transform_0, window_bounds = array<i64: 128, 16>}, {pipeline_mode = #tpu.pipeline_mode<synchronous>, transform_indices = @transform_1, window_bounds = array<i64: 28, 16>}, {pipeline_mode = #tpu.pipeline_mode<synchronous>, transform_indices = @transform_2, window_bounds = array<i64: 28, 1>}, {pipeline_mode = #tpu.pipeline_mode<synchronous>, transform_indices = @transform_3, window_bounds = array<i64: 4, 28>}, {pipeline_mode = #tpu.pipeline_mode<synchronous>, transform_indices = @transform_4, window_bounds = array<i64: 4, 1>}, {transform_indices = @transform_5, window_bounds = array<i64: 4, 128>}]} {
    %c0 = arith.constant 0 : index
    %c0_0 = arith.constant 0 : index
    %0 = vector.load %arg1[%c0, %c0_0] : memref<128x16xf32, #tpu.memory_space<vmem>>, vector<128x16xf32>
    %c0_1 = arith.constant 0 : index
    %c0_2 = arith.constant 0 : index
    %1 = vector.load %arg2[%c0_1, %c0_2] : memref<28x16xf32, #tpu.memory_space<vmem>>, vector<28x16xf32>
    %cst = arith.constant dense<0.000000e+00> : vector<28x128xf32>
    %2 = tpu.matmul %1, %0, %cst {dimension_numbers = #tpu.dot_dimension_numbers<[1], [1], [0], [0], [0, 0, 1, 0], [], []>} : vector<28x16xf32>, vector<128x16xf32>, vector<28x128xf32> -> vector<28x128xf32>
    %c0_3 = arith.constant 0 : index
    %c0_4 = arith.constant 0 : index
    %3 = vector.load %arg3[%c0_3, %c0_4] : memref<28x1xf32, #tpu.memory_space<vmem>>, vector<28x1xf32>
    %4 = vector.broadcast %3 : vector<28x1xf32> to vector<28x128xf32>
    %5 = arith.addf %2, %4 : vector<28x128xf32>
    %cst_5 = arith.constant 0.000000e+00 : f32
    %6 = vector.broadcast %cst_5 : f32 to vector<28x128xf32>
    %7 = arith.maximumf %5, %6 : vector<28x128xf32>
    %c0_6 = arith.constant 0 : index
    %c0_7 = arith.constant 0 : index
    %8 = vector.load %arg4[%c0_6, %c0_7] : memref<4x28xf32, #tpu.memory_space<vmem>>, vector<4x28xf32>
    %cst_8 = arith.constant dense<0.000000e+00> : vector<4x128xf32>
    %9 = tpu.matmul %8, %7, %cst_8 {dimension_numbers = #tpu.dot_dimension_numbers<[1], [0], [0], [1], [0, 0, 1, 1], [], []>} : vector<4x28xf32>, vector<28x128xf32>, vector<4x128xf32> -> vector<4x128xf32>
    %c0_9 = arith.constant 0 : index
    %c0_10 = arith.constant 0 : index
    %10 = vector.load %arg5[%c0_9, %c0_10] : memref<4x1xf32, #tpu.memory_space<vmem>>, vector<4x1xf32>
    %11 = vector.broadcast %10 : vector<4x1xf32> to vector<4x128xf32>
    %12 = arith.addf %9, %11 : vector<4x128xf32>
    %cst_11 = arith.constant dense<0xFF800000> : vector<128xf32>
    %13 = vector.multi_reduction <maximumf>, %12, %cst_11 [0] : vector<4x128xf32> to vector<128xf32>
    %14 = vector.shape_cast %13 : vector<128xf32> to vector<1x128xf32>
    %15 = vector.broadcast %14 : vector<1x128xf32> to vector<4x128xf32>
    %16 = arith.subf %12, %15 : vector<4x128xf32>
    %17 = math.exp %16 : vector<4x128xf32>
    %cst_12 = arith.constant dense<0.000000e+00> : vector<128xf32>
    %18 = vector.multi_reduction <add>, %17, %cst_12 [0] : vector<4x128xf32> to vector<128xf32>
    %19 = vector.shape_cast %18 : vector<128xf32> to vector<1x128xf32>
    %20 = vector.broadcast %19 : vector<1x128xf32> to vector<4x128xf32>
    %21 = arith.divf %17, %20 : vector<4x128xf32>
    %c0_13 = arith.constant 0 : index
    %c0_14 = arith.constant 0 : index
    %22 = vector.load %arg6[%c0_13, %c0_14] : memref<4x128xf32, #tpu.memory_space<vmem>>, vector<4x128xf32>
    tpu.vector_store %arg6[%c0_13, %c0_14], %21 {strides = array<i32>} : memref<4x128xf32, #tpu.memory_space<vmem>>, vector<4x128xf32>,
    return
  }
  func.func @transform_0(%arg0: i32) -> (i32, i32) {
    %c0_i32 = arith.constant 0 : i32
    %c0_i32_0 = arith.constant 0 : i32
    return %arg0, %c0_i32 : i32, i32
  }
  func.func @transform_1(%arg0: i32) -> (i32, i32) {
    %c0_i32 = arith.constant 0 : i32
    %c0_i32_0 = arith.constant 0 : i32
    %c0_i32_1 = arith.constant 0 : i32
    return %c0_i32, %c0_i32_0 : i32, i32
  }
  func.func @transform_2(%arg0: i32) -> (i32, i32) {
    %c0_i32 = arith.constant 0 : i32
    %c0_i32_0 = arith.constant 0 : i32
    %c0_i32_1 = arith.constant 0 : i32
    return %c0_i32, %c0_i32_0 : i32, i32
  }
  func.func @transform_3(%arg0: i32) -> (i32, i32) {
    %c0_i32 = arith.constant 0 : i32
    %c0_i32_0 = arith.constant 0 : i32
    %c0_i32_1 = arith.constant 0 : i32
    return %c0_i32, %c0_i32_0 : i32, i32
  }
  func.func @transform_4(%arg0: i32) -> (i32, i32) {
    %c0_i32 = arith.constant 0 : i32
    %c0_i32_0 = arith.constant 0 : i32
    %c0_i32_1 = arith.constant 0 : i32
    return %c0_i32, %c0_i32_0 : i32, i32
  }
  func.func @transform_5(%arg0: i32) -> (i32, i32) {
    %c0_i32 = arith.constant 0 : i32
    %c0_i32_0 = arith.constant 0 : i32
    return %c0_i32, %arg0 : i32, i32
  }
}

</mosaic_0001>

<llo_original>
// kernel: tpu_custom_call.1
$region0: #{tpu_custom_call.1}
  #allocation0 [shape = 'u32[]', space=smem, size = 0x4, offset = 0x4, fixed_abs, tag = 'smem constant byte address 0x4 - core index']
  #allocation1 [shape = 'u32[144,128]{1,0:T(1,128)}', space=vmem, size = 0x12000, scoped, tag = 'internal scratch']
  %s0 = inlined_call_operand.vmem [shape: f32[128,16], index: 0, kind: input, shape index: {}]
  %s1 = inlined_call_operand.vmem [shape: f32[28,16], index: 1, kind: input, shape index: {}]
  %s2 = inlined_call_operand.vmem [shape: f32[28,1], index: 2, kind: input, shape index: {}]
  %s3 = inlined_call_operand.vmem [shape: f32[4,28], index: 3, kind: input, shape index: {}]
  %s4 = inlined_call_operand.vmem [shape: f32[4,1], index: 4, kind: input, shape index: {}]
  %s5 = inlined_call_operand.hbm [shape: f32[4,128], index: 5, kind: output, shape index: {}]
  %s6 = sld [smem:[#allocation0]]
  $region30: #{tpu_custom_call.1} parent=0
    _
  %s8 = ssub.s32 1, %s6
  %s9 = scalar_select 0, %s8, %s6
  $region1: #{tpu_custom_call.1} parent=0
    #allocation2 [shape = 'u8[2048]{0}', space=vmem, size = 0x800, scoped, tag = 'output window, operand 0, single buffered']
    #allocation3 [shape = 's32[1]{0}', space=sflag, size = 0x4, scoped, tag = 'scoped memory for tpu_custom_call.1']
    %10 = vsyncpa [#allocation3], 0
    // Predicated region
    $region2: #{tpu_custom_call.1} parent=1 // pred_check
      _
    $region3: #{tpu_custom_call.1} parent=1 // pred_check_branch
      %12 = sbr.rel (0) target = $region5
    $region4: #{tpu_custom_call.1} parent=1 // pred_region
      _
    $region5: #{tpu_custom_call.1} parent=1 // pred_fallthru
      _
    // Predicated region
    $region6: #{tpu_custom_call.1} parent=1 // pred_check
      _
    $region7: #{tpu_custom_call.1} parent=1 // pred_check_branch
      %14 = sbr.rel (0) target = $region9
    $region8: #{tpu_custom_call.1} parent=1 // pred_region
      _
    $region9: #{tpu_custom_call.1} parent=1 // pred_fallthru
      _
    // Predicated region
    $region10: #{tpu_custom_call.1} parent=1 // pred_check
      _
    $region11: #{tpu_custom_call.1} parent=1 // pred_check_branch
      %16 = sbr.rel (0) target = $region13
    $region12: #{tpu_custom_call.1} parent=1 // pred_region
      _
    $region13: #{tpu_custom_call.1} parent=1 // pred_fallthru
      _
    // Predicated region
    $region14: #{tpu_custom_call.1} parent=1 // pred_check
      _
    $region15: #{tpu_custom_call.1} parent=1 // pred_check_branch
      %18 = sbr.rel (0) target = $region17
    $region16: #{tpu_custom_call.1} parent=1 // pred_region
      _
    $region17: #{tpu_custom_call.1} parent=1 // pred_fallthru
      _
    // Predicated region
    $region18: #{tpu_custom_call.1} parent=1 // pred_check
      _
    $region19: #{tpu_custom_call.1} parent=1 // pred_check_branch
      %20 = sbr.rel (0) target = $region21
    $region20: #{tpu_custom_call.1} parent=1 // pred_region
      _
    $region21: #{tpu_custom_call.1} parent=1 // pred_fallthru
      _
    %v21 = vld [vmem:[%s0] sm:$0xff]
    %v22 = vld [vmem:[%s0 + $0x8] sm:$0xff]
    %v23 = vld [vmem:[%s0 + $0x10] sm:$0xff]
    %v24 = vld [vmem:[%s0 + $0x18] sm:$0xff]
    %v25 = vld [vmem:[%s0 + $0x20] sm:$0xff]
    %v26 = vld [vmem:[%s0 + $0x28] sm:$0xff]
    %v27 = vld [vmem:[%s0 + $0x30] sm:$0xff]
    %v28 = vld [vmem:[%s0 + $0x38] sm:$0xff]
    %v29 = vld [vmem:[%s0 + $0x40] sm:$0xff]
    %v30 = vld [vmem:[%s0 + $0x48] sm:$0xff]
    %v31 = vld [vmem:[%s0 + $0x50] sm:$0xff]
    %v32 = vld [vmem:[%s0 + $0x58] sm:$0xff]
    %v33 = vld [vmem:[%s0 + $0x60] sm:$0xff]
    %v34 = vld [vmem:[%s0 + $0x68] sm:$0xff]
    %v35 = vld [vmem:[%s0 + $0x70] sm:$0xff]
    %v36 = vld [vmem:[%s0 + $0x78] sm:$0xff]
    %v37 = vld [vmem:[%s1] sm:$0xff]
    %v38 = vld [vmem:[%s1 + $0x8] sm:$0xff]
    %v39 = vld [vmem:[%s1 + $0x10] sm:$0xff]
    %v40 = vld [vmem:[%s1 + $0x18] sm:$0xf]
    %v41 = vld [vmem:[%s2] sm:$0xff]
    %v42 = vld [vmem:[%s2 + $0x8] sm:$0xff]
    %v43 = vld [vmem:[%s2 + $0x10] sm:$0xff]
    %v44 = vld [vmem:[%s2 + $0x18] sm:$0xf]
    %46 = vset.pattern.permute.xlu0 0
    %47 = vperm.xlu0 %46, %v41
    %v48 = vpop.permute.xlu0 %47
    %51 = vset.pattern.permute.xlu0 0
    %52 = vperm.xlu0 %51, %v42
    %v53 = vpop.permute.xlu0 %52
    %56 = vset.pattern.permute.xlu0 0
    %57 = vperm.xlu0 %56, %v43
    %v58 = vpop.permute.xlu0 %57
    %61 = vset.pattern.permute.xlu0 0
    %62 = vperm.xlu0 %61, %v44
    %v63 = vpop.permute.xlu0 %62
    %vm65 = vcmask 130048
    %v67 = vsel %vm65, %v37, 0
    %v70 = vsel %vm65, %v38, 0
    %v73 = vsel %vm65, %v39, 0
    %v76 = vsel %vm65, %v40, 0
    %v79 = vsel %vm65, %v21, 0
    %v82 = vsel %vm65, %v22, 0
    %v85 = vsel %vm65, %v23, 0
    %v88 = vsel %vm65, %v24, 0
    %v91 = vsel %vm65, %v25, 0
    %v94 = vsel %vm65, %v26, 0
    %v97 = vsel %vm65, %v27, 0
    %v100 = vsel %vm65, %v28, 0
    %v103 = vsel %vm65, %v29, 0
    %v106 = vsel %vm65, %v30, 0
    %v109 = vsel %vm65, %v31, 0
    %v112 = vsel %vm65, %v32, 0
    %v115 = vsel %vm65, %v33, 0
    %v118 = vsel %vm65, %v34, 0
    %v121 = vsel %vm65, %v35, 0
    %v124 = vsel %vm65, %v36, 0
    %126 = vmatprep.subr.mxu0 0.0
    %127 = vmatpush1.xpose.msra.mxu0 %v79
    %128 = vmatprep.subr.mxu0 0.0
    %129 = vmatpush1.xpose.msra.mxu0 %v82
    %130 = vmatprep.subr.mxu0 0.0
    %131 = vmatpush1.xpose.msra.mxu0 %v85
    %132 = vmatprep.subr.mxu0 0.0
    %133 = vmatpush1.xpose.msra.mxu0 %v88
    %134 = vmatprep.subr.mxu0 0.0
    %135 = vmatpush1.xpose.msra.mxu0 %v91
    %136 = vmatprep.subr.mxu0 0.0
    %137 = vmatpush1.xpose.msra.mxu0 %v94
    %138 = vmatprep.subr.mxu0 0.0
    %139 = vmatpush1.xpose.msra.mxu0 %v97
    %140 = vmatprep.subr.mxu0 0.0
    %141 = vmatpush1.xpose.msra.mxu0 %v100
    %142 = vmatprep.subr.mxu0 0.0
    %143 = vmatpush1.xpose.msra.mxu0 %v103
    %144 = vmatprep.subr.mxu0 0.0
    %145 = vmatpush1.xpose.msra.mxu0 %v106
    %146 = vmatprep.subr.mxu0 0.0
    %147 = vmatpush1.xpose.msra.mxu0 %v109
    %148 = vmatprep.subr.mxu0 0.0
    %149 = vmatpush1.xpose.msra.mxu0 %v112
    %150 = vmatprep.subr.mxu0 0.0
    %151 = vmatpush1.xpose.msra.mxu0 %v115
    %152 = vmatprep.subr.mxu0 0.0
    %153 = vmatpush1.xpose.msra.mxu0 %v118
    %154 = vmatprep.subr.mxu0 0.0
    %155 = vmatpush1.xpose.msra.mxu0 %v121
    %156 = vmatprep.subr.mxu0 0.0
    %157 = vmatpush1.xpose.msra.mxu0 %v124
    %158 = vmatprep.subr.mxu0 0.0
    %159 = vmatpush1.xpose.msra.mxu0 0.0
    %160 = vmatprep.subr.mxu0 0.0
    %161 = vmatpush1.xpose.msra.mxu0 0.0
    %162 = vmatprep.subr.mxu0 0.0
    %163 = vmatpush1.xpose.msra.mxu0 0.0
    %164 = vmatprep.subr.mxu0 0.0
    %165 = vmatpush1.xpose.msra.mxu0 0.0
    %166 = vmatprep.subr.mxu0 0.0
    %167 = vmatpush1.xpose.msra.mxu0 0.0
    %168 = vmatprep.subr.mxu0 0.0
    %169 = vmatpush1.xpose.msra.mxu0 0.0
    %170 = vmatprep.subr.mxu0 0.0
    %171 = vmatpush1.xpose.msra.mxu0 0.0
    %172 = vmatprep.subr.mxu0 0.0
    %173 = vmatpush1.xpose.msra.mxu0 0.0
    %174 = vmatprep.subr.mxu0 0.0
    %175 = vmatpush1.xpose.msra.mxu0 0.0
    %176 = vmatprep.subr.mxu0 0.0
    %177 = vmatpush1.xpose.msra.mxu0 0.0
    %178 = vmatprep.subr.mxu0 0.0
    %179 = vmatpush1.xpose.msra.mxu0 0.0
    %180 = vmatprep.subr.mxu0 0.0
    %181 = vmatpush1.xpose.msra.mxu0 0.0
    %182 = vmatprep.subr.mxu0 0.0
    %183 = vmatpush1.xpose.msra.mxu0 0.0
    %184 = vmatprep.subr.mxu0 0.0
    %185 = vmatpush1.xpose.msra.mxu0 0.0
    %186 = vmatprep.subr.mxu0 0.0
    %187 = vmatpush1.xpose.msra.mxu0 0.0
    %188 = vmatprep.subr.mxu0 0.0
    %189 = vmatpush1.xpose.msra.mxu0 0.0
    %190 = vmatprep.mubr.f32.mxu0 0.0
    %191 = vmatmul.mubr.f32.gmra.mrb[0].mxu0 %v67
    %v192 = vpop.f32.mrb[0].mxu0
    %v193 = vadd.f32 %v48, %v192
    %v194 = vpop.f32.mrb[0].mxu0
    %195 = vmatprep.mubr.f32.mxu0 0.0
    %196 = vmatmul.mubr.f32.gmra.mrb[0].mxu0 %v70
    %v197 = vpop.f32.mrb[0].mxu0
    %v198 = vadd.f32 %v53, %v197
    %v199 = vpop.f32.mrb[0].mxu0
    %200 = vmatprep.mubr.f32.mxu0 0.0
    %201 = vmatmul.mubr.f32.gmra.mrb[0].mxu0 %v73
    %v202 = vpop.f32.mrb[0].mxu0
    %v203 = vadd.f32 %v58, %v202
    %v204 = vpop.f32.mrb[0].mxu0
    %205 = vmatprep.mubr.f32.mxu0 0.0
    %206 = vmatmul.mubr.f32.gmra.mrb[0].mxu0 %v76
    %v207 = vpop.f32.mrb[0].mxu0
    %v208 = vadd.f32 %v63, %v207
    %v209 = vpop.f32.mrb[0].mxu0
    %210 = vdwg.mxu0
    %v211 = vmax.f32 %v193, 0.0
    %v212 = vmax.f32 %v198, 0.0
    %v213 = vmax.f32 %v203, 0.0
    %v214 = vmax.f32 %v208, 0.0
    %v215 = vld [vmem:[%s3] sm:$0xf]
    %v216 = vld [vmem:[%s4] sm:$0xf]
    %218 = vset.pattern.permute.xlu0 0
    %219 = vperm.xlu0 %218, %v216
    %v220 = vpop.permute.xlu0 %219
    %vm222 = vcmask 228352
    %v224 = vsel %vm222, %v215, 0
    %vm226 = vcmask 1043456
    %v228 = vsel %vm226, %v214, 0
    %230 = vmatprep.subr.mxu0 0.0
    %231 = vmatpush1.msra.mxu0 %v211
    %232 = vmatprep.subr.mxu0 0.0
    %233 = vmatpush1.msra.mxu0 %v212
    %234 = vmatprep.subr.mxu0 0.0
    %235 = vmatpush1.msra.mxu0 %v213
    %236 = vmatprep.subr.mxu0 0.0
    %237 = vmatpush1.msra.mxu0 %v228
    %238 = vmatprep.subr.mxu0 0.0
    %239 = vmatpush1.msra.mxu0 0.0
    %240 = vmatprep.subr.mxu0 0.0
    %241 = vmatpush1.msra.mxu0 0.0
    %242 = vmatprep.subr.mxu0 0.0
    %243 = vmatpush1.msra.mxu0 0.0
    %244 = vmatprep.subr.mxu0 0.0
    %245 = vmatpush1.msra.mxu0 0.0
    %246 = vmatprep.subr.mxu0 0.0
    %247 = vmatpush1.msra.mxu0 0.0
    %248 = vmatprep.subr.mxu0 0.0
    %249 = vmatpush1.msra.mxu0 0.0
    %250 = vmatprep.subr.mxu0 0.0
    %251 = vmatpush1.msra.mxu0 0.0
    %252 = vmatprep.subr.mxu0 0.0
    %253 = vmatpush1.msra.mxu0 0.0
    %254 = vmatprep.subr.mxu0 0.0
    %255 = vmatpush1.msra.mxu0 0.0
    %256 = vmatprep.subr.mxu0 0.0
    %257 = vmatpush1.msra.mxu0 0.0
    %258 = vmatprep.subr.mxu0 0.0
    %259 = vmatpush1.msra.mxu0 0.0
    %260 = vmatprep.subr.mxu0 0.0
    %261 = vmatpush1.msra.mxu0 0.0
    %262 = vmatprep.subr.mxu0 0.0
    %263 = vmatpush1.msra.mxu0 0.0
    %264 = vmatprep.subr.mxu0 0.0
    %265 = vmatpush1.msra.mxu0 0.0
    %266 = vmatprep.subr.mxu0 0.0
    %267 = vmatpush1.msra.mxu0 0.0
    %268 = vmatprep.subr.mxu0 0.0
    %269 = vmatpush1.msra.mxu0 0.0
    %270 = vmatprep.subr.mxu0 0.0
    %271 = vmatpush1.msra.mxu0 0.0
    %272 = vmatprep.subr.mxu0 0.0
    %273 = vmatpush1.msra.mxu0 0.0
    %274 = vmatprep.subr.mxu0 0.0
    %275 = vmatpush1.msra.mxu0 0.0
    %276 = vmatprep.subr.mxu0 0.0
    %277 = vmatpush1.msra.mxu0 0.0
    %278 = vmatprep.subr.mxu0 0.0
    %279 = vmatpush1.msra.mxu0 0.0
    %280 = vmatprep.subr.mxu0 0.0
    %281 = vmatpush1.msra.mxu0 0.0
    %282 = vmatprep.subr.mxu0 0.0
    %283 = vmatpush1.msra.mxu0 0.0
    %284 = vmatprep.subr.mxu0 0.0
    %285 = vmatpush1.msra.mxu0 0.0
    %286 = vmatprep.subr.mxu0 0.0
    %287 = vmatpush1.msra.mxu0 0.0
    %288 = vmatprep.subr.mxu0 0.0
    %289 = vmatpush1.msra.mxu0 0.0
    %290 = vmatprep.subr.mxu0 0.0
    %291 = vmatpush1.msra.mxu0 0.0
    %292 = vmatprep.subr.mxu0 0.0
    %293 = vmatpush1.msra.mxu0 0.0
    %294 = vmatprep.mubr.f32.mxu0 0.0
    %295 = vmatmul.mubr.f32.gmra.mrb[0].mxu0 %v224
    %v296 = vpop.f32.mrb[0].mxu0
    %v297 = vadd.f32 %v220, %v296
    %v298 = vpop.f32.mrb[0].mxu0
    %299 = vdwg.mxu0
    %v300 = vsel %vm226, %v297, -inf
    %v301 = vrot.slane %v300, 4
    %v302 = vmax.f32 %v300, %v301
    %v303 = vrot.slane %v302, 2
    %v304 = vmax.f32 %v302, %v303
    %v305 = vrot.slane %v304, 1
    %v306 = vmax.f32 %v304, %v305
    %v307 = vsub.f32 %v297, %v306
    %v308 = vmul.f32 %v307, 1.442695
    %v309 = vpow.pop %v308
    %v310 = vsel %vm226, %v309, 0.0
    %v311 = vrot.slane %v310, 4
    %v312 = vadd.f32 %v310, %v311
    %v313 = vrot.slane %v312, 2
    %v314 = vadd.f32 %v312, %v313
    %v315 = vrot.slane %v314, 1
    %v316 = vadd.f32 %v314, %v315
    %v317 = vrcp.pop %v316
    %v318 = vmul.f32 %v309, %v317
    %319 = vst [vmem:[#allocation2] sm:$0xf] %v318
    // Predicated region
    $region22: #{tpu_custom_call.1} parent=1 // pred_check
      _
    $region23: #{tpu_custom_call.1} parent=1 // pred_check_branch
      %321 = sbr.rel (0) target = $region25
    $region24: #{tpu_custom_call.1} parent=1 // pred_region
      %s323 = ssub.s32 64, 64
      %324 = vsyncadd [#allocation3], %s323
      %s326 = sshll.u32 [#allocation2], 4
      %s327 = int_to_ptr.vmem [resolvable:$true] %s326
      %329 = dma.vmem_to_hbm [thread:$0]  %s327, 64, %s5, [#allocation3]
    $region25: #{tpu_custom_call.1} parent=1 // pred_fallthru
      _
    // Predicated region
    $region26: #{tpu_custom_call.1} parent=1 // pred_check
      _
    $region27: #{tpu_custom_call.1} parent=1 // pred_check_branch
      %331 = sbr.rel (0) target = $region29
    $region28: #{tpu_custom_call.1} parent=1 // pred_region
      %332 = dma.done [#allocation3], 64
    $region29: #{tpu_custom_call.1} parent=1 // pred_fallthru
      _
    %333 = vsyncpa [#allocation3], 1

</llo_original>
